<compile_context>
chip_gen: v7x
topology: tpu7x:2x2x1
jax: 0.10.0
libtpu: 0.0.40
codegen_flags: <defaults>
</compile_context>

<pallas_src>
import functools

import jax
import jax.numpy as jnp
import numpy as np
from jax import lax
from jax.experimental import pallas as pl
from jax.experimental.pallas import tpu as pltpu

CLASS_DIM_LLAMA = 128  # stand-in for args.class_dim_llama (deterministic, in-script)


def _round_up(x, m):
    return ((x + m - 1) // m) * m


def _cdiv(a, b):
    return -(-a // b)


def _onehot_kernel(labels_ref, out_ref, *, probabilities, tile_cols):
    """One grid step: build a (tile_rows, tile_cols) slab of one-hot rows."""
    tile_rows, _ = out_ref.shape
    col0 = pl.program_id(1) * tile_cols  # global class offset of this tile
    # global class index of every lane in this tile: (tile_rows, tile_cols)
    c_iota = lax.broadcasted_iota(jnp.int32, (tile_rows, tile_cols), 1) + col0

    # Fold the zero-init into the first list's where (saves one full-tile pass).
    lab0 = labels_ref[:, 0:1]  # (tile_rows, 1) int32
    out = jnp.where(c_iota == lab0, jnp.float32(probabilities[0]), jnp.float32(0.0))

    # num_lists is tiny & static -> unrolled Python loop; last write wins,
    # matching the torch assignment semantics.
    for li in range(1, len(probabilities)):
        lab = labels_ref[:, li:li + 1]
        out = jnp.where(c_iota == lab, jnp.float32(probabilities[li]), out)

    out_ref[...] = out


def llm_label_onehot(LLM_label, batch_size, T, num_lists, probabilities,
                     class_dim=CLASS_DIM_LLAMA, tile_rows=1024, tile_cols=2048):
    """JAX/Pallas equivalent of LLMLabelOnehot.forward."""
    single = list(probabilities) in ([1], [1.0])
    if single:
        # (B, T) labels; the single list writes 1.0 at the label index.
        labels = LLM_label.reshape(batch_size * T, 1).astype(jnp.int32)
        probs = (1.0,)
    else:
        # (B, num_lists, T) -> (B, T, num_lists) -> (B*T, num_lists)
        labels = jnp.transpose(LLM_label, (0, 2, 1)).reshape(
            batch_size * T, num_lists).astype(jnp.int32)
        probs = tuple(float(p) for p in probabilities)
    n_cols = labels.shape[1]

    rows = batch_size * T

    # --- row tiling: split rows evenly into tiles, each a multiple of 8 ------
    tile_rows = max(8, min(tile_rows, _round_up(rows, 8)))
    n_row_tiles = _cdiv(rows, tile_rows)
    tile_rows = _round_up(_cdiv(rows, n_row_tiles), 8)
    rows_padded = tile_rows * n_row_tiles
    if rows_padded != rows:
        labels = jnp.pad(labels, ((0, rows_padded - rows), (0, 0)))

    # --- class tiling: lane-dense (multiple of 128), split evenly ------------
    class_padded = _round_up(class_dim, 128)
    tile_cols = max(128, min(tile_cols, class_padded))
    n_col_tiles = _cdiv(class_padded, tile_cols)
    tile_cols = _round_up(_cdiv(class_padded, n_col_tiles), 128)
    class_padded = tile_cols * n_col_tiles

    grid = (n_row_tiles, n_col_tiles)

    kernel = functools.partial(_onehot_kernel, probabilities=probs,
                               tile_cols=tile_cols)

    cost = pl.CostEstimate(
        flops=len(probs) * rows_padded * class_padded,
        transcendentals=0,
        bytes_accessed=rows_padded * class_padded * 4 + rows_padded * n_cols * 4,
    )

    out = pl.pallas_call(
        kernel,
        out_shape=jax.ShapeDtypeStruct((rows_padded, class_padded), jnp.float32),
        grid_spec=pltpu.PrefetchScalarGridSpec(
            num_scalar_prefetch=0,
            grid=grid,
            in_specs=[
                # labels block depends only on the row-tile index i; the class
                # axis j is innermost, so this DMA fires once per row tile.
                pl.BlockSpec((tile_rows, n_cols), lambda i, j: (i, 0)),
            ],
            out_specs=pl.BlockSpec((tile_rows, tile_cols), lambda i, j: (i, j)),
        ),
        compiler_params=pltpu.CompilerParams(
            dimension_semantics=("parallel", "parallel"),
            vmem_limit_bytes=48 * 1024 * 1024,
        ),
        cost_estimate=cost,
    )(labels)

    out = out[:rows, :class_dim]
    return out.reshape(batch_size, T, class_dim)


def _reference(LLM_label, batch_size, T, num_lists, probabilities, class_dim):
    """Plain numpy port of the torch loops, for verification."""
    lbl = np.asarray(LLM_label)
    out = np.zeros((batch_size * T, class_dim), np.float32)
    for b in range(batch_size):
        for t in range(T):
            row = np.zeros(class_dim, np.float32)
            for li in range(num_lists):
                if list(probabilities) == [1]:
                    row[lbl[b][t]] = probabilities[li]
                else:
                    row[lbl[b][li][t]] = probabilities[li]
            out[b * T + t, :] = row
    return out.reshape(batch_size, T, class_dim)


if __name__ == "__main__":
    batch_size, T, num_lists = 2, 8, 3
    probabilities = [0.5, 0.3, 0.2]
    class_dim = CLASS_DIM_LLAMA

    key = jax.random.PRNGKey(0)
    # multi-list case: labels (B, num_lists, T) of class indices
    LLM_label = jax.random.randint(
        key, (batch_size, num_lists, T), minval=0, maxval=class_dim, dtype=jnp.int32)

    out = llm_label_onehot(LLM_label, batch_size, T, num_lists, probabilities, class_dim)
    out = jax.block_until_ready(out)

    ref = _reference(LLM_label, batch_size, T, num_lists, probabilities, class_dim)
    np.testing.assert_allclose(np.asarray(out), ref, rtol=0, atol=0)

    # single-list ([1]) case: labels (B, T); num_lists must be 1 (the torch
    # module itself would raise IndexError otherwise).
    LLM_label_1 = jax.random.randint(
        jax.random.PRNGKey(1), (batch_size, T), minval=0, maxval=class_dim, dtype=jnp.int32)
    out1 = jax.block_until_ready(
        llm_label_onehot(LLM_label_1, batch_size, T, 1, [1], class_dim))
    ref1 = _reference(LLM_label_1, batch_size, T, 1, [1], class_dim)
    np.testing.assert_allclose(np.asarray(out1), ref1, rtol=0, atol=0)

    print("KERNEL_OK")
</pallas_src>

<mosaic_0001>
module attributes {stable_mosaic.version = 11 : i64} {
  func.func @_onehot_kernel(%arg0: i32, %arg1: i32, %arg2: memref<16x3xi32, #tpu.memory_space<vmem>>, %arg3: memref<16x128xf32, #tpu.memory_space<vmem>>) attributes {dimension_semantics = [#tpu.dimension_semantics<parallel>, #tpu.dimension_semantics<parallel>], iteration_bounds = array<i64: 1, 1>, scalar_prefetch = 0 : i64, scratch_operands = 0 : i64, tpu.core_type = #tpu.core_type<tc>, window_params = [{transform_indices = @transform_0, window_bounds = array<i64: 16, 3>}, {transform_indices = @transform_1, window_bounds = array<i64: 16, 128>}]} {
    %c128_i32 = arith.constant 128 : i32
    %0 = arith.muli %arg1, %c128_i32 : i32
    %1 = tpu.iota {dimensions = array<i32: 1>} : vector<16x128xi32>
    %2 = vector.broadcast %0 : i32 to vector<16x128xi32>
    %3 = arith.addi %1, %2 : vector<16x128xi32>
    %c0 = arith.constant 0 : index
    %c0_0 = arith.constant 0 : index
    %4 = vector.load %arg2[%c0, %c0_0] : memref<16x3xi32, #tpu.memory_space<vmem>>, vector<16x1xi32>
    %5 = vector.broadcast %4 : vector<16x1xi32> to vector<16x128xi32>
    %6 = arith.cmpi eq, %3, %5 : vector<16x128xi32>
    %cst = arith.constant 5.000000e-01 : f32
    %cst_1 = arith.constant 0.000000e+00 : f32
    %7 = vector.broadcast %cst : f32 to vector<16x128xf32>
    %8 = vector.broadcast %cst_1 : f32 to vector<16x128xf32>
    %9 = arith.select %6, %7, %8 : vector<16x128xi1>, vector<16x128xf32>
    %c0_2 = arith.constant 0 : index
    %c1 = arith.constant 1 : index
    %10 = vector.load %arg2[%c0_2, %c1] : memref<16x3xi32, #tpu.memory_space<vmem>>, vector<16x1xi32>
    %11 = vector.broadcast %10 : vector<16x1xi32> to vector<16x128xi32>
    %12 = arith.cmpi eq, %3, %11 : vector<16x128xi32>
    %cst_3 = arith.constant 3.000000e-01 : f32
    %13 = vector.broadcast %cst_3 : f32 to vector<16x128xf32>
    %14 = arith.select %12, %13, %9 : vector<16x128xi1>, vector<16x128xf32>
    %c0_4 = arith.constant 0 : index
    %c2 = arith.constant 2 : index
    %15 = vector.load %arg2[%c0_4, %c2] : memref<16x3xi32, #tpu.memory_space<vmem>>, vector<16x1xi32>
    %16 = vector.broadcast %15 : vector<16x1xi32> to vector<16x128xi32>
    %17 = arith.cmpi eq, %3, %16 : vector<16x128xi32>
    %cst_5 = arith.constant 2.000000e-01 : f32
    %18 = vector.broadcast %cst_5 : f32 to vector<16x128xf32>
    %19 = arith.select %17, %18, %14 : vector<16x128xi1>, vector<16x128xf32>
    %c0_6 = arith.constant 0 : index
    %c0_7 = arith.constant 0 : index
    %20 = vector.load %arg3[%c0_6, %c0_7] : memref<16x128xf32, #tpu.memory_space<vmem>>, vector<16x128xf32>
    tpu.vector_store %arg3[%c0_6, %c0_7], %19 {strides = array<i32>} : memref<16x128xf32, #tpu.memory_space<vmem>>, vector<16x128xf32>,
    return
  }
  func.func @transform_0(%arg0: i32, %arg1: i32) -> (i32, i32) {
    %c0_i32 = arith.constant 0 : i32
    %c0_i32_0 = arith.constant 0 : i32
    return %arg0, %c0_i32 : i32, i32
  }
  func.func @transform_1(%arg0: i32, %arg1: i32) -> (i32, i32) {
    %c0_i32 = arith.constant 0 : i32
    return %arg0, %arg1 : i32, i32
  }
}

</mosaic_0001>

<llo_original>
// kernel: tpu_custom_call.1
$region0: #{tpu_custom_call.1}
  #allocation0 [shape = 'u32[]', space=smem, size = 0x4, offset = 0x4, fixed_abs, tag = 'smem constant byte address 0x4 - core index']
  #allocation1 [shape = 'u32[144,128]{1,0:T(1,128)}', space=vmem, size = 0x12000, scoped, tag = 'internal scratch']
  %s0 = inlined_call_operand.vmem [shape: s32[16,3], index: 0, kind: input, shape index: {}]
  %s1 = inlined_call_operand.hbm [shape: f32[16,128], index: 1, kind: output, shape index: {}]
  %s2 = sld [smem:[#allocation0]]
  $region14: #{tpu_custom_call.1} parent=0
    _
  %s4 = ssub.s32 1, %s2
  %s5 = scalar_select 0, %s4, %s2
  $region1: #{tpu_custom_call.1} parent=0
    #allocation2 [shape = 'u8[8192]{0}', space=vmem, size = 0x2000, scoped, tag = 'output window, operand 0, single buffered']
    #allocation3 [shape = 's32[1]{0}', space=sflag, size = 0x4, scoped, tag = 'scoped memory for tpu_custom_call.1']
    %6 = vsyncpa [#allocation3], 0
    // Predicated region
    $region2: #{tpu_custom_call.1} parent=1 // pred_check
      _
    $region3: #{tpu_custom_call.1} parent=1 // pred_check_branch
      %8 = sbr.rel (0) target = $region5
    $region4: #{tpu_custom_call.1} parent=1 // pred_region
      _
    $region5: #{tpu_custom_call.1} parent=1 // pred_fallthru
      _
    %s9 = smul.u32 0, 128
    %v10 = vlaneseq
    %v11 = vand.u32 %v10, 127
    %v12 = vstv %s9
    %v13 = vadd.s32 %v11, %v12
    %v14 = vld [vmem:[%s0] sm:$0xff]
    %v15 = vld [vmem:[%s0 + $0x8] sm:$0xff]
    %16 = vset.pattern.permute.xlu0 0
    %17 = vperm.xlu0 %16, %v14
    %v18 = vpop.permute.xlu0 %17
    %19 = vset.pattern.permute.xlu0 0
    %20 = vperm.xlu0 %19, %v15
    %v21 = vpop.permute.xlu0 %20
    %vm22 = vcmp.eq.s32.totalorder %v13, %v18
    %vm23 = vcmp.eq.s32.totalorder %v13, %v21
    %v24 = vsel %vm22, 0.5, 0.0
    %v25 = vsel %vm23, 0.5, 0.0
    %26 = vset.pattern.permute.xlu0 1
    %27 = vperm.xlu0 %26, %v14
    %v28 = vpop.permute.xlu0 %27
    %29 = vset.pattern.permute.xlu0 1
    %30 = vperm.xlu0 %29, %v15
    %v31 = vpop.permute.xlu0 %30
    %vm32 = vcmp.eq.s32.totalorder %v13, %v28
    %vm33 = vcmp.eq.s32.totalorder %v13, %v31
    %v34 = vsel %vm32, 0.3, %v24
    %v35 = vsel %vm33, 0.3, %v25
    %36 = vset.pattern.permute.xlu0 2
    %37 = vperm.xlu0 %36, %v14
    %v38 = vpop.permute.xlu0 %37
    %39 = vset.pattern.permute.xlu0 2
    %40 = vperm.xlu0 %39, %v15
    %v41 = vpop.permute.xlu0 %40
    %vm42 = vcmp.eq.s32.totalorder %v13, %v38
    %vm43 = vcmp.eq.s32.totalorder %v13, %v41
    %v44 = vsel %vm42, 0.2, %v34
    %v45 = vsel %vm43, 0.2, %v35
    %46 = vst [vmem:[#allocation2] sm:$0xff] %v44
    %47 = vst [vmem:[#allocation2 + $0x8] sm:$0xff] %v45
    // Predicated region
    $region6: #{tpu_custom_call.1} parent=1 // pred_check
      _
    $region7: #{tpu_custom_call.1} parent=1 // pred_check_branch
      %49 = sbr.rel (0) target = $region9
    $region8: #{tpu_custom_call.1} parent=1 // pred_region
      %s51 = ssub.s32 256, 256
      %52 = vsyncadd [#allocation3], %s51
      %s53 = sshll.u32 [#allocation2], 4
      %s54 = int_to_ptr.vmem [resolvable:$true] %s53
      %59 = dma.vmem_to_hbm [thread:$0]  %s54, 256, %s1, [#allocation3], 128, 128, 8
    $region9: #{tpu_custom_call.1} parent=1 // pred_fallthru
      _
    // Predicated region
    $region10: #{tpu_custom_call.1} parent=1 // pred_check
      _
    $region11: #{tpu_custom_call.1} parent=1 // pred_check_branch
      %61 = sbr.rel (0) target = $region13
    $region12: #{tpu_custom_call.1} parent=1 // pred_region
      %62 = dma.done [#allocation3], 256
    $region13: #{tpu_custom_call.1} parent=1 // pred_fallthru
      _
    %63 = vsyncpa [#allocation3], 1

</llo_original>
